<compile_context>
chip_gen: v7x
topology: tpu7x:2x2x1
jax: 0.10.0
libtpu: 0.0.40
codegen_flags: <defaults>
</compile_context>

<pallas_src>
import functools

import jax
import jax.numpy as jnp
from jax import lax
from jax.experimental import pallas as pl
from jax.experimental.pallas import tpu as pltpu


def _round_up(x, m):
    return (x + m - 1) // m * m


def _detected_vmem_bytes():
    """Physical VMEM bytes of the attached TPU, or None if undetectable."""
    try:
        return int(pltpu.get_tpu_info().vmem_capacity_bytes)
    except Exception:
        return None


def _choose_tiles(L, pad, tl_max):
    """Pick (TL, HW).

    HW = halo block width: smallest multiple of 128 covering pad.
    TL = length tile: multiple of 128 (lane-dense stores), capped near tl_max,
         and a multiple of HW so one HW-block of the previous tile fully
         contains the causal halo.
    """
    HW = max(128, _round_up(pad, 128))
    TL = _round_up(L, 128) if L <= tl_max else _round_up(tl_max, 128)
    TL = _round_up(max(TL, HW), HW)
    return TL, HW


def _causal_conv1d_kernel(w_ref, b_ref, xc_ref, xh_ref, o_ref, *scratch,
                          kernel_size, dilation, use_scratch):
    """One (batch n, length-tile j) grid step.

    w_ref : (Cout, K*Cin)  bf16  weight-normed weights, tap-major flattened
    b_ref : (Cout, 1)      f32   bias
    xc_ref: (1, Cin, TL)         current length tile of batch element n
    xh_ref: (1, Cin, HW)         tail HW-block of the PREVIOUS tile (halo src)
    o_ref : (1, Cout, TL)        output tile
    scratch: optional single (K*Cin, TL) bf16 im2col buffer
    """
    Cin, TL = xc_ref.shape[1], xc_ref.shape[2]
    pad = (kernel_size - 1) * dilation
    j = pl.program_id(1)

    # Cast to bf16 BEFORE building the shifted window: halves vreg/VMEM bytes
    # moved by the lane shifts and the concat (no-op if x is already bf16).
    cur = xc_ref[0].astype(jnp.bfloat16)                           # (Cin, TL)
    if pad > 0:
        HW = xh_ref.shape[2]
        # Causal halo = last `pad` samples of the previous tile's tail block;
        # zeroed for the first tile of each batch element (condition on j, so
        # it resets per batch and stale data cannot leak across batches).
        tail = xh_ref[0, :, HW - pad:].astype(jnp.bfloat16)        # (Cin, pad)
        halo = jnp.where(j > 0, tail, jnp.zeros_like(tail))
        win = jnp.concatenate([halo, cur], axis=1)                 # (Cin, TL+pad)
    else:
        win = cur

    # im2col over the K taps: rows [k*Cin, (k+1)*Cin) hold x shifted by k*dil.
    if kernel_size == 1:
        xim = win
    elif use_scratch:
        # Explicit VMEM scratch: plain vld/vst per tap, no K-way concat value
        # for the register allocator to live-range (spill relief at Cin>=128).
        xim_ref = scratch[0]
        for k in range(kernel_size):
            xim_ref[k * Cin:(k + 1) * Cin, :] = \
                win[:, k * dilation:k * dilation + TL]
        xim = xim_ref[...]
    else:
        xim = jnp.concatenate(
            [win[:, k * dilation:k * dilation + TL]
             for k in range(kernel_size)], axis=0)

    # Single fused MXU matmul (contraction depth K*Cin), bf16 operands,
    # f32 accumulation; bias add and output stay f32 (or x's dtype).
    acc = jnp.dot(w_ref[...], xim, preferred_element_type=jnp.float32)
    o_ref[0] = (acc + b_ref[...]).astype(o_ref.dtype)


def causal_conv1d(x, weight_v, weight_g, bias, *, dilation=1, tl_max=None):
    """Causal dilated conv1d with weight norm.  x: (N, Cin, L) -> (N, Cout, L).

    Pass x in bf16 to halve HBM read traffic; output keeps x's dtype.
    """
    N, Cin, L = x.shape
    Cout, _, K = weight_v.shape
    pad = (K - 1) * dilation

    # ---- plain-JAX glue: weight-norm reparam + tap-major weight flattening ----
    v = weight_v.astype(jnp.float32)
    v_norm = jnp.sqrt(jnp.sum(v * v, axis=(1, 2), keepdims=True))        # (Cout,1,1)
    w = weight_g.reshape(Cout, 1, 1).astype(jnp.float32) * v / v_norm    # (Cout,Cin,K)
    # fused column k*Cin + i  <->  W[:, i, k]; bf16 MXU operand.
    w_fused = jnp.transpose(w, (0, 2, 1)).reshape(Cout, K * Cin).astype(jnp.bfloat16)
    b2 = bias.reshape(Cout, 1).astype(jnp.float32)

    # ---- generation-aware tile cap: bigger tiles on 128 MiB VMEM parts ----
    vmem_cap = _detected_vmem_bytes()
    if tl_max is None:
        tl_max = 2048 if (vmem_cap is not None and
                          vmem_cap >= 100 * 1024 * 1024) else 1024

    TL, HW = _choose_tiles(L, pad, tl_max)
    nL = pl.cdiv(L, TL)
    L_r = nL * TL
    x_in = x if L_r == L else jnp.pad(x, ((0, 0), (0, 0), (0, L_r - L)))

    use_scratch = (K > 1) and (Cin % 8 == 0)
    scratch_shapes = ([pltpu.VMEM((K * Cin, TL), jnp.bfloat16)]
                      if use_scratch else [])

    kernel = functools.partial(_causal_conv1d_kernel, kernel_size=K,
                               dilation=dilation, use_scratch=use_scratch)

    # ---- explicit VMEM limit from the actual buffers (double-buffered) ----
    xb = x_in.dtype.itemsize
    ob = x.dtype.itemsize
    per_step = (2 * Cin * TL * xb            # current tile, double-buffered
                + 2 * Cin * HW * xb          # halo tail block, double-buffered
                + 2 * Cout * TL * ob         # output tile, double-buffered
                + 2 * Cout * K * Cin * 2     # bf16 weights
                + 2 * Cout * 4               # bias
                + (K * Cin * TL * 2 if use_scratch else 0))
    cap = vmem_cap if vmem_cap is not None else 64 * 1024 * 1024
    vmem_limit = int(min(cap, max(32 * 1024 * 1024, 2 * per_step)))

    cost = pl.CostEstimate(
        flops=2 * N * Cout * Cin * K * L_r,
        transcendentals=0,
        bytes_accessed=(N * Cin * L_r * xb           # x read once
                        + N * nL * Cin * HW * xb     # small halo re-reads
                        + w_fused.size * 2 + b2.size * 4
                        + N * Cout * L_r * ob),      # output writes
    )

    r = TL // HW                                     # halo blocks per length tile
    out = pl.pallas_call(
        kernel,
        out_shape=jax.ShapeDtypeStruct((N, Cout, L_r), x.dtype),
        grid_spec=pltpu.PrefetchScalarGridSpec(
            num_scalar_prefetch=0,
            grid=(N, nL),
            in_specs=[
                pl.BlockSpec((Cout, K * Cin), lambda n, j: (0, 0)),   # weights
                pl.BlockSpec((Cout, 1), lambda n, j: (0, 0)),         # bias
                pl.BlockSpec((1, Cin, TL), lambda n, j: (n, 0, j)),   # current tile
                # Halo: only the tail HW-block of the previous length tile
                # (clamped to block 0 for j==0; kernel zeroes it there).
                pl.BlockSpec((1, Cin, HW),
                             lambda n, j: (n, 0, jnp.maximum(j * r - 1, 0))),
            ],
            out_specs=pl.BlockSpec((1, Cout, TL), lambda n, j: (n, 0, j)),
            scratch_shapes=scratch_shapes,
        ),
        compiler_params=pltpu.CompilerParams(
            # Both axes independent: batch x length-tiles shard across v7x's
            # two TensorCores even for small N; neutral on v5e/v6e.
            dimension_semantics=("parallel", "parallel"),
            vmem_limit_bytes=vmem_limit),
        cost_estimate=cost,
    )(w_fused, b2, x_in, x_in)

    return out if L_r == L else out[:, :, :L]


def _reference(x, weight_v, weight_g, bias, dilation):
    Cout, _, K = weight_v.shape
    w = (weight_g.reshape(Cout, 1, 1) * weight_v /
         jnp.sqrt(jnp.sum(weight_v ** 2, axis=(1, 2), keepdims=True)))
    y = lax.conv_general_dilated(
        x, w, window_strides=(1,),
        padding=[((K - 1) * dilation, 0)],
        rhs_dilation=(dilation,),
        dimension_numbers=("NCH", "OIH", "NCH"),
    )
    return y + bias.reshape(1, Cout, 1)


if __name__ == "__main__":
    key = jax.random.PRNGKey(0)
    kx, kv, kb, kx2, kv3, kb3, kx3 = jax.random.split(key, 7)

    # Case 1: module-consistent small shapes: batch=2, Cin=4, Cout=8, L=16, K=3, d=2.
    N, Cin, Cout, L, K, dilation = 2, 4, 8, 16, 3, 2
    x = jax.random.normal(kx, (N, Cin, L), dtype=jnp.float32)
    weight_v = jax.random.normal(kv, (Cout, Cin, K), dtype=jnp.float32) * 0.3
    # PyTorch weight_norm initializes g = ||v|| per output channel.
    weight_g = jnp.sqrt(jnp.sum(weight_v ** 2, axis=(1, 2)))
    bias = jax.random.normal(kb, (Cout,), dtype=jnp.float32) * 0.1

    y = jax.block_until_ready(
        causal_conv1d(x, weight_v, weight_g, bias, dilation=dilation))
    y_ref = _reference(x, weight_v, weight_g, bias, dilation)
    assert y.shape == (N, Cout, L)
    # bf16 MXU operands -> relaxed tolerance (accumulation stays f32).
    assert jnp.allclose(y, y_ref, atol=5e-2, rtol=5e-2), "mismatch vs reference"

    # Case 2: multi-tile path (causal halo fetched from the previous tile's
    # tail block), concat im2col path (Cin not a multiple of 8).
    L2 = 256
    x2 = jax.random.normal(kx2, (N, Cin, L2), dtype=jnp.float32)
    y2 = jax.block_until_ready(
        causal_conv1d(x2, weight_v, weight_g, bias, dilation=dilation, tl_max=128))
    y2_ref = _reference(x2, weight_v, weight_g, bias, dilation)
    assert y2.shape == (N, Cout, L2)
    assert jnp.allclose(y2, y2_ref, atol=5e-2, rtol=5e-2), "multi-tile mismatch"

    # Case 3: multi-tile + VMEM im2col scratch path (Cin % 8 == 0) + larger dilation.
    Cin3, Cout3, K3, d3, L3 = 16, 32, 3, 4, 384
    x3 = jax.random.normal(kx3, (N, Cin3, L3), dtype=jnp.float32)
    v3 = jax.random.normal(kv3, (Cout3, Cin3, K3), dtype=jnp.float32) * 0.2
    g3 = jnp.sqrt(jnp.sum(v3 ** 2, axis=(1, 2)))
    b3 = jax.random.normal(kb3, (Cout3,), dtype=jnp.float32) * 0.1
    y3 = jax.block_until_ready(
        causal_conv1d(x3, v3, g3, b3, dilation=d3, tl_max=128))
    y3_ref = _reference(x3, v3, g3, b3, d3)
    assert y3.shape == (N, Cout3, L3)
    assert jnp.allclose(y3, y3_ref, atol=5e-2, rtol=5e-2), "scratch-path mismatch"

    print("KERNEL_OK")
</pallas_src>

<mosaic_0001>
module attributes {stable_mosaic.version = 11 : i64} {
  func.func @_causal_conv1d_kernel(%arg0: i32, %arg1: i32, %arg2: memref<8x12xbf16, #tpu.memory_space<vmem>>, %arg3: memref<8x1xf32, #tpu.memory_space<vmem>>, %arg4: memref<1x4x128xf32, #tpu.memory_space<vmem>>, %arg5: memref<1x4x128xf32, #tpu.memory_space<vmem>>, %arg6: memref<1x8x128xf32, #tpu.memory_space<vmem>>) attributes {dimension_semantics = [#tpu.dimension_semantics<parallel>, #tpu.dimension_semantics<parallel>], iteration_bounds = array<i64: 2, 1>, scalar_prefetch = 0 : i64, scratch_operands = 0 : i64, tpu.core_type = #tpu.core_type<tc>, window_params = [{pipeline_mode = #tpu.pipeline_mode<synchronous>, transform_indices = @transform_0, window_bounds = array<i64: 8, 12>}, {pipeline_mode = #tpu.pipeline_mode<synchronous>, transform_indices = @transform_1, window_bounds = array<i64: 8, 1>}, {transform_indices = @transform_2, window_bounds = array<i64: 1, 4, 128>}, {transform_indices = @transform_3, window_bounds = array<i64: 1, 4, 128>}, {transform_indices = @transform_4, window_bounds = array<i64: 1, 8, 128>}]} {
    %c0 = arith.constant 0 : index
    %c0_0 = arith.constant 0 : index
    %c0_1 = arith.constant 0 : index
    %0 = vector.load %arg4[%c0, %c0_0, %c0_1] : memref<1x4x128xf32, #tpu.memory_space<vmem>>, vector<1x4x128xf32>
    %1 = vector.shape_cast %0 : vector<1x4x128xf32> to vector<4x128xf32>
    %2 = arith.truncf %1 : vector<4x128xf32> to vector<4x128xbf16>
    %c0_2 = arith.constant 0 : index
    %c0_3 = arith.constant 0 : index
    %c124 = arith.constant 124 : index
    %3 = vector.load %arg5[%c0_2, %c0_3, %c124] : memref<1x4x128xf32, #tpu.memory_space<vmem>>, vector<1x4x4xf32>
    %4 = vector.shape_cast %3 : vector<1x4x4xf32> to vector<4x4xf32>
    %5 = arith.truncf %4 : vector<4x4xf32> to vector<4x4xbf16>
    %c0_i32 = arith.constant 0 : i32
    %6 = arith.cmpi sgt, %arg1, %c0_i32 : i32
    %cst = arith.constant 0.000000e+00 : bf16
    %7 = vector.broadcast %cst : bf16 to vector<4x4xbf16>
    %8 = arith.select %6, %5, %7 : vector<4x4xbf16>
    %9 = tpu.concatenate %8, %2 in 1 : vector<4x4xbf16>, vector<4x128xbf16> -> vector<4x132xbf16>
    %10 = vector.extract_strided_slice %9 {offsets = [0, 0], sizes = [4, 128], strides = [1, 1]} : vector<4x132xbf16> to vector<4x128xbf16>
    %11 = vector.extract_strided_slice %9 {offsets = [0, 2], sizes = [4, 128], strides = [1, 1]} : vector<4x132xbf16> to vector<4x128xbf16>
    %12 = vector.extract_strided_slice %9 {offsets = [0, 4], sizes = [4, 128], strides = [1, 1]} : vector<4x132xbf16> to vector<4x128xbf16>
    %13 = tpu.concatenate %10, %11, %12 in 0 : vector<4x128xbf16>, vector<4x128xbf16>, vector<4x128xbf16> -> vector<12x128xbf16>
    %c0_4 = arith.constant 0 : index
    %c0_5 = arith.constant 0 : index
    %14 = vector.load %arg2[%c0_4, %c0_5] : memref<8x12xbf16, #tpu.memory_space<vmem>>, vector<8x12xbf16>
    %cst_6 = arith.constant dense<0.000000e+00> : vector<8x128xf32>
    %15 = tpu.matmul %14, %13, %cst_6 {dimension_numbers = #tpu.dot_dimension_numbers<[1], [0], [0], [1], [0, 0, 1, 1], [], []>} : vector<8x12xbf16>, vector<12x128xbf16>, vector<8x128xf32> -> vector<8x128xf32>
    %c0_7 = arith.constant 0 : index
    %c0_8 = arith.constant 0 : index
    %16 = vector.load %arg3[%c0_7, %c0_8] : memref<8x1xf32, #tpu.memory_space<vmem>>, vector<8x1xf32>
    %17 = vector.broadcast %16 : vector<8x1xf32> to vector<8x128xf32>
    %18 = arith.addf %15, %17 : vector<8x128xf32>
    %c0_9 = arith.constant 0 : index
    %c0_10 = arith.constant 0 : index
    %c0_11 = arith.constant 0 : index
    %19 = vector.load %arg6[%c0_9, %c0_10, %c0_11] : memref<1x8x128xf32, #tpu.memory_space<vmem>>, vector<1x8x128xf32>
    %20 = vector.shape_cast %19 : vector<1x8x128xf32> to vector<8x128xf32>
    %21 = vector.shape_cast %18 : vector<8x128xf32> to vector<1x8x128xf32>
    tpu.vector_store %arg6[%c0_9, %c0_10, %c0_11], %21 {strides = array<i32>} : memref<1x8x128xf32, #tpu.memory_space<vmem>>, vector<1x8x128xf32>,
    return
  }
  func.func @transform_0(%arg0: i32, %arg1: i32) -> (i32, i32) {
    %c0_i32 = arith.constant 0 : i32
    %c0_i32_0 = arith.constant 0 : i32
    %c0_i32_1 = arith.constant 0 : i32
    return %c0_i32, %c0_i32_0 : i32, i32
  }
  func.func @transform_1(%arg0: i32, %arg1: i32) -> (i32, i32) {
    %c0_i32 = arith.constant 0 : i32
    %c0_i32_0 = arith.constant 0 : i32
    %c0_i32_1 = arith.constant 0 : i32
    return %c0_i32, %c0_i32_0 : i32, i32
  }
  func.func @transform_2(%arg0: i32, %arg1: i32) -> (i32, i32, i32) {
    %c0_i32 = arith.constant 0 : i32
    %c0_i32_0 = arith.constant 0 : i32
    return %arg0, %c0_i32, %arg1 : i32, i32, i32
  }
  func.func @transform_3(%arg0: i32, %arg1: i32) -> (i32, i32, i32) {
    %c1_i32 = arith.constant 1 : i32
    %0 = arith.muli %arg1, %c1_i32 : i32
    %c1_i32_0 = arith.constant 1 : i32
    %1 = arith.subi %0, %c1_i32_0 : i32
    %c0_i32 = arith.constant 0 : i32
    %2 = arith.maxsi %1, %c0_i32 : i32
    %c0_i32_1 = arith.constant 0 : i32
    %c0_i32_2 = arith.constant 0 : i32
    return %arg0, %c0_i32_1, %2 : i32, i32, i32
  }
  func.func @transform_4(%arg0: i32, %arg1: i32) -> (i32, i32, i32) {
    %c0_i32 = arith.constant 0 : i32
    %c0_i32_0 = arith.constant 0 : i32
    return %arg0, %c0_i32, %arg1 : i32, i32, i32
  }
}

</mosaic_0001>

<llo_original>
// kernel: tpu_custom_call.1
$region0: #{tpu_custom_call.1}
  #allocation0 [shape = 'u32[]', space=smem, size = 0x4, offset = 0x4, fixed_abs, tag = 'smem constant byte address 0x4 - core index']
  #allocation1 [shape = 'u32[144,128]{1,0:T(1,128)}', space=vmem, size = 0x12000, scoped, tag = 'internal scratch']
  %s0 = inlined_call_operand.hbm [shape: bf16[8,12], index: 0, kind: input, shape index: {}]
  %s1 = inlined_call_operand.vmem [shape: f32[8,1], index: 1, kind: input, shape index: {}]
  %s2 = inlined_call_operand.vmem [shape: f32[2,4,128], index: 2, kind: input, shape index: {}]
  %s3 = inlined_call_operand.vmem [shape: f32[2,4,128], index: 3, kind: input, shape index: {}]
  %s4 = inlined_call_operand.hbm [shape: f32[2,8,128], index: 4, kind: output, shape index: {}]
  %s5 = sld [smem:[#allocation0]]
  $region53: #{tpu_custom_call.1} parent=0
    _
  %s7 = ssub.s32 1, %s5
  %s8 = scalar_select 0, %s7, %s5
  $region1: #{tpu_custom_call.1} parent=0
    #allocation2 [shape = 'u8[2048]{0}', space=vmem, size = 0x800, scoped, tag = 'input window, operand 0, single buffered']
    #allocation3 [shape = 's32[2]{0}', space=sflag, size = 0x8, scoped, tag = 'scoped memory for tpu_custom_call.1']
    #allocation4 [shape = 's32[2]{0}', space=sflag, size = 0x8, scoped, tag = 'scoped memory for tpu_custom_call.1']
    #allocation5 [shape = 'u8[8192]{0}', space=vmem, size = 0x2000, scoped, tag = 'output window, operand 0']
    %9 = vsyncpa [#allocation3], 0
    %10 = vsyncpa [#allocation4], 0
    %s11 = scalar_lea.sflag [#allocation4], 1
    %12 = vsyncpa %s11, 0
    loop: start=0, step=1, limit=4
    $region2: #{tpu_custom_call.1} parent=1 // loop_pre_header
      _
    $region3: #{tpu_custom_call.1} parent=1 // loop_header
      %s14 = sphi 0, %s18
      %p15 = scmp.ge.s32.totalorder %s14, 4
      %s21 = sphi 0, %s33
      %s22 = sphi 0, %s29
      %s23 = sphi 0, %s21
      %s24 = sphi 0, %s22
      %s25 = sphi 0, %s23
      %s26 = sphi 0, %s24
      %s34 = sphi 0, %s34
      %s36 = sphi 0, %s34
      %s37 = sphi 0, %s36
      %s51 = sphi 0, %s37
      %s55 = sphi 0, %s55
      %s57 = sphi 0, %s55
      %s58 = sphi 0, %s57
      %s72 = sphi 0, %s58
      %s80 = sphi 0, %s82
      %s83 = sphi 0, %s80
      %s84 = sphi 0, %s83
      %s100 = sphi 0, %s84
      %s114 = sphi 0, %s116
      %s117 = sphi 0, %s114
      %s118 = sphi 0, %s117
      %s134 = sphi 0, %s118
      %s142 = sphi 0, %s144
      %s145 = sphi 0, %s142
      %s146 = sphi 0, %s145
      %s162 = sphi 0, %s146
    $region4: #{tpu_custom_call.1} parent=1 // loop_header_branch
      %17 = sbr.rel (%p15) target = $region8
    $region5: #{tpu_custom_call.1} parent=1 // loop_body
      %s19 = ssub.s32 %s14, 1
      %s20 = ssub.s32 %s14, 2
      %s27 = sadd.s32 1, %s22
      %p28 = scmp.ge.s32.totalorder %s27, 1
      %s29 = scalar_select %p28, 0, %s27
      %s30 = sadd.s32 1, %s21
      %s31 = scalar_select %p28, %s30, %s21
      %p32 = scmp.ge.s32.totalorder %s31, 2
      %s33 = scalar_select %p32, 0, %s31
      %s35 = sadd.s32 %s34, 1
      %p38 = scmp.eq.s32.totalorder %s14, 1
      %p39 = scmp.ne.s32.totalorder %s34, %s36
      %p40 = scmp.eq.s32.totalorder %s14, 0
      %p41 = por %p39, %p40
      %p42 = scmp.ne.s32.totalorder %s34, %s36
      %p43 = scmp.eq.s32.totalorder %s19, 1
      %p44 = por %p42, %p43
      %p45 = scmp.ne.s32.totalorder %s36, %s37
      %p46 = scmp.eq.s32.totalorder %s19, 0
      %p47 = por %p45, %p46
      %p48 = scmp.ne.s32.totalorder %s36, %s37
      %p49 = scmp.eq.s32.totalorder %s20, 1
      %p50 = por %p48, %p49
      %p52 = scmp.ne.s32.totalorder %s37, %s51
      %p53 = scmp.eq.s32.totalorder %s20, 0
      %p54 = por %p52, %p53
      %s56 = sadd.s32 %s55, 1
      %p59 = scmp.eq.s32.totalorder %s14, 1
      %p60 = scmp.ne.s32.totalorder %s55, %s57
      %p61 = scmp.eq.s32.totalorder %s14, 0
      %p62 = por %p60, %p61
      %p63 = scmp.ne.s32.totalorder %s55, %s57
      %p64 = scmp.eq.s32.totalorder %s19, 1
      %p65 = por %p63, %p64
      %p66 = scmp.ne.s32.totalorder %s57, %s58
      %p67 = scmp.eq.s32.totalorder %s19, 0
      %p68 = por %p66, %p67
      %p69 = scmp.ne.s32.totalorder %s57, %s58
      %p70 = scmp.eq.s32.totalorder %s20, 1
      %p71 = por %p69, %p70
      %p73 = scmp.ne.s32.totalorder %s58, %s72
      %p74 = scmp.eq.s32.totalorder %s20, 0
      %p75 = por %p73, %p74
      %s76 = ssub.s32 %s21, %s33
      %s77 = ssub.s32 %s22, %s29
      %s78 = sor.u32 %s76, %s77
      %p79 = scmp.eq.s32.totalorder %s78, 0
      %s81 = sadd.s32 %s80, 1
      %s82 = scalar_select %p79, %s80, %s81
      %p85 = pneg %p79
      %p86 = scmp.eq.s32.totalorder %s14, 1
      %p87 = por %p85, %p86
      %p88 = scmp.ne.s32.totalorder %s80, %s83
      %p89 = scmp.eq.s32.totalorder %s14, 0
      %p90 = por %p88, %p89
      %p91 = scmp.ne.s32.totalorder %s80, %s83
      %p92 = scmp.eq.s32.totalorder %s19, 1
      %p93 = por %p91, %p92
      %p94 = scmp.ne.s32.totalorder %s83, %s84
      %p95 = scmp.eq.s32.totalorder %s19, 0
      %p96 = por %p94, %p95
      %p97 = scmp.ne.s32.totalorder %s83, %s84
      %p98 = scmp.eq.s32.totalorder %s20, 1
      %p99 = por %p97, %p98
      %p101 = scmp.ne.s32.totalorder %s84, %s100
      %p102 = scmp.eq.s32.totalorder %s20, 0
      %p103 = por %p101, %p102
      %s104 = ssub.s32 %s22, 1
      %p105 = scmp.gt.s32.totalorder %s104, 0
      %s106 = scalar_select %p105, %s104, 0
      %s107 = ssub.s32 %s29, 1
      %p108 = scmp.gt.s32.totalorder %s107, 0
      %s109 = scalar_select %p108, %s107, 0
      %s110 = ssub.s32 %s21, %s33
      %s111 = ssub.s32 %s106, %s109
      %s112 = sor.u32 %s110, %s111
      %p113 = scmp.eq.s32.totalorder %s112, 0
      %s115 = sadd.s32 %s114, 1
      %s116 = scalar_select %p113, %s114, %s115
      %p119 = pneg %p113
      %p120 = scmp.eq.s32.totalorder %s14, 1
      %p121 = por %p119, %p120
      %p122 = scmp.ne.s32.totalorder %s114, %s117
      %p123 = scmp.eq.s32.totalorder %s14, 0
      %p124 = por %p122, %p123
      %p125 = scmp.ne.s32.totalorder %s114, %s117
      %p126 = scmp.eq.s32.totalorder %s19, 1
      %p127 = por %p125, %p126
      %p128 = scmp.ne.s32.totalorder %s117, %s118
      %p129 = scmp.eq.s32.totalorder %s19, 0
      %p130 = por %p128, %p129
      %p131 = scmp.ne.s32.totalorder %s117, %s118
      %p132 = scmp.eq.s32.totalorder %s20, 1
      %p133 = por %p131, %p132
      %p135 = scmp.ne.s32.totalorder %s118, %s134
      %p136 = scmp.eq.s32.totalorder %s20, 0
      %p137 = por %p135, %p136
      %s138 = ssub.s32 %s21, %s33
      %s139 = ssub.s32 %s22, %s29
      %s140 = sor.u32 %s138, %s139
      %p141 = scmp.eq.s32.totalorder %s140, 0
      %s143 = sadd.s32 %s142, 1
      %s144 = scalar_select %p141, %s142, %s143
      %p147 = pneg %p141
      %p148 = scmp.eq.s32.totalorder %s14, 1
      %p149 = por %p147, %p148
      %p150 = scmp.ne.s32.totalorder %s142, %s145
      %p151 = scmp.eq.s32.totalorder %s14, 0
      %p152 = por %p150, %p151
      %p153 = scmp.ne.s32.totalorder %s142, %s145
      %p154 = scmp.eq.s32.totalorder %s19, 1
      %p155 = por %p153, %p154
      %p156 = scmp.ne.s32.totalorder %s145, %s146
      %p157 = scmp.eq.s32.totalorder %s19, 0
      %p158 = por %p156, %p157
      %p159 = scmp.ne.s32.totalorder %s145, %s146
      %p160 = scmp.eq.s32.totalorder %s20, 1
      %p161 = por %p159, %p160
      %p163 = scmp.ne.s32.totalorder %s146, %s162
      %p164 = scmp.eq.s32.totalorder %s20, 0
      %p165 = por %p163, %p164
      %p166 = scmp.le.s32.totalorder 1, %s14
      %p167 = scmp.lt.s32.totalorder %s14, 3
      %p168 = pnand %p166, %p167
      %p169 = pneg %p168
      // Predicated region
      $region9: #{tpu_custom_call.1} parent=5 // pred_check
        _
      $region10: #{tpu_custom_call.1} parent=5 // pred_check_branch
        %171 = sbr.rel (%p168) target = $region12
      $region11: #{tpu_custom_call.1} parent=5 // pred_region
        %s172 = ssub.s32 %s14, 1
        // Predicated region
        $region13: #{tpu_custom_call.1} parent=11 // pred_check
          %p173 = pneg %p47
        $region14: #{tpu_custom_call.1} parent=11 // pred_check_branch
          %175 = sbr.rel (%p173) target = $region16
        $region15: #{tpu_custom_call.1} parent=11 // pred_region
          %s177 = ssub.s32 64, 64
          %178 = vsyncadd [#allocation3], %s177
          %s180 = sshll.u32 [#allocation2], 4
          %s181 = int_to_ptr.vmem [resolvable:$true] %s180
          %183 = dma.hbm_to_vmem [thread:$0]  %s0, 64, %s181, [#allocation3]
        $region16: #{tpu_custom_call.1} parent=11 // pred_fallthru
          _
        // Predicated region
        $region17: #{tpu_custom_call.1} parent=11 // pred_check
          %p184 = pneg %p68
        $region18: #{tpu_custom_call.1} parent=11 // pred_check_branch
          %186 = sbr.rel (%p184) target = $region20
        $region19: #{tpu_custom_call.1} parent=11 // pred_region
          _
        $region20: #{tpu_custom_call.1} parent=11 // pred_fallthru
          _
      $region12: #{tpu_custom_call.1} parent=5 // pred_fallthru
        _
      %p187 = scmp.lt.s32.totalorder %s14, 2
      // Predicated region
      $region21: #{tpu_custom_call.1} parent=5 // pred_check
        %p188 = pneg %p187
      $region22: #{tpu_custom_call.1} parent=5 // pred_check_branch
        %190 = sbr.rel (%p188) target = $region24
      $region23: #{tpu_custom_call.1} parent=5 // pred_region
        // Predicated region
        $region25: #{tpu_custom_call.1} parent=23 // pred_check
          %p191 = pneg %p90
        $region26: #{tpu_custom_call.1} parent=23 // pred_check_branch
          %193 = sbr.rel (%p191) target = $region28
        $region27: #{tpu_custom_call.1} parent=23 // pred_region
          %p194 = scmp.lt.s32.totalorder %s21, 1
          %s195 = scalar_select %p194, %s21, 1
          %p196 = scmp.lt.s32.totalorder %s22, 0
          %s197 = scalar_select %p196, %s22, 0
          %s198 = sadd.s32 %s197, %s195
          %s199 = smul.addr %s198, 4
          %s200 = scalar_lea.vmem %s2, %s199
        $region28: #{tpu_custom_call.1} parent=23 // pred_fallthru
          _
        // Predicated region
        $region29: #{tpu_custom_call.1} parent=23 // pred_check
          %p201 = pneg %p124
        $region30: #{tpu_custom_call.1} parent=23 // pred_check_branch
          %203 = sbr.rel (%p201) target = $region32
        $region31: #{tpu_custom_call.1} parent=23 // pred_region
          %s204 = ssub.s32 %s22, 1
          %p205 = scmp.gt.s32.totalorder %s204, 0
          %s206 = scalar_select %p205, %s204, 0
          %p207 = scmp.lt.s32.totalorder %s21, 1
          %s208 = scalar_select %p207, %s21, 1
          %p209 = scmp.lt.s32.totalorder %s206, 0
          %s210 = scalar_select %p209, %s206, 0
          %s211 = sadd.s32 %s210, %s208
          %s212 = smul.addr %s211, 4
          %s213 = scalar_lea.vmem %s3, %s212
          %s214 = ssub.s32 %s22, 1
          %p215 = scmp.gt.s32.totalorder %s214, 0
          %s216 = scalar_select %p215, %s214, 0
        $region32: #{tpu_custom_call.1} parent=23 // pred_fallthru
          _
      $region24: #{tpu_custom_call.1} parent=5 // pred_fallthru
        _
      %p217 = scmp.le.s32.totalorder 1, %s14
      %p218 = scmp.lt.s32.totalorder %s14, 3
      %p219 = pnand %p217, %p218
      %p220 = pneg %p219
      // Predicated region
      $region33: #{tpu_custom_call.1} parent=5 // pred_check
        _
      $region34: #{tpu_custom_call.1} parent=5 // pred_check_branch
        %222 = sbr.rel (%p219) target = $region36
      $region35: #{tpu_custom_call.1} parent=5 // pred_region
        %s223 = ssub.s32 %s14, 1
        // Predicated region
        $region37: #{tpu_custom_call.1} parent=35 // pred_check
          %p224 = pneg %p47
        $region38: #{tpu_custom_call.1} parent=35 // pred_check_branch
          %226 = sbr.rel (%p224) target = $region40
        $region39: #{tpu_custom_call.1} parent=35 // pred_region
          %227 = dma.done [#allocation3], 64
        $region40: #{tpu_custom_call.1} parent=35 // pred_fallthru
          _
        %p228 = pneg %p47
        %p229 = pneg %p44
        %p230 = pneg %p68
        %p231 = pneg %p65
        %p232 = scmp.lt.s32.totalorder %s23, 1
        %s233 = scalar_select %p232, %s23, 1
        %p234 = scmp.lt.s32.totalorder %s24, 0
        %s235 = scalar_select %p234, %s24, 0
        %s236 = sadd.s32 %s235, %s233
        %s237 = smul.addr %s236, 4
        %s238 = scalar_lea.vmem %s2, %s237
        %p239 = pneg %p96
        %p240 = pneg %p93
        %s241 = ssub.s32 %s24, 1
        %p242 = scmp.gt.s32.totalorder %s241, 0
        %s243 = scalar_select %p242, %s241, 0
        %p244 = scmp.lt.s32.totalorder %s23, 1
        %s245 = scalar_select %p244, %s23, 1
        %p246 = scmp.lt.s32.totalorder %s243, 0
        %s247 = scalar_select %p246, %s243, 0
        %s248 = sadd.s32 %s247, %s245
        %s249 = smul.addr %s248, 4
        %s250 = scalar_lea.vmem %s3, %s249
        %p251 = pneg %p130
        %p252 = pneg %p127
        %p253 = pneg %p158
        %p254 = pneg %p155
        %s255 = sand.u32 %s145, 1
        %s256 = scalar_lea.sflag [#allocation4], %s255
        %s257 = sand.u32 %s145, 1
        %s258 = smul.addr %s257, 8
        %s259 = scalar_lea.vmem [#allocation5], %s258
        %p260 = scmp.lt.s32.totalorder %s23, 1
        %s261 = scalar_select %p260, %s23, 1
        %p262 = scmp.lt.s32.totalorder %s24, 0
        %s263 = scalar_select %p262, %s24, 0
        %s264 = sadd.s32 %s263, %s261
        %s265 = smul.addr %s264, 4
        %s266 = scalar_lea.vmem %s2, %s265
        %s267 = ssub.s32 %s24, 1
        %p268 = scmp.gt.s32.totalorder %s267, 0
        %s269 = scalar_select %p268, %s267, 0
        %p270 = scmp.lt.s32.totalorder %s23, 1
        %s271 = scalar_select %p270, %s23, 1
        %p272 = scmp.lt.s32.totalorder %s269, 0
        %s273 = scalar_select %p272, %s269, 0
        %s274 = sadd.s32 %s273, %s271
        %s275 = smul.addr %s274, 4
        %s276 = scalar_lea.vmem %s3, %s275
        %s277 = ssub.s32 %s24, 1
        %p278 = scmp.gt.s32.totalorder %s277, 0
        %s279 = scalar_select %p278, %s277, 0
        %v281 = vld [vmem:[%s266] sm:$0xf]
        %v282 = vpack.c.bf16 %v281, %v281
        %v283 = vld [vmem:[%s276] sm:$0xf]
        %v284 = vpack.c.bf16 %v283, %v283
        %p285 = scmp.gt.s32.totalorder %s24, 0
        %s286 = scalar_select %p285, 1, 0
        %v287 = vstv %s286
        %vm288 = vcmp.eq.s32.totalorder %v287, 1
        %v289 = vsel %vm288, %v284, 0
        %291 = vrot.lane.b32.xlu0 %v289, 4
        %v292 = vpop.permute.xlu0 %291
        %294 = vrot.lane.b32.xlu0 %v282, 4
        %v295 = vpop.permute.xlu0 %294
        %vm296 = vcmask 31744
        %v299 = vsel %vm296, %v292, %v295
        %v301 = vrot.slane %v299, 6
        %v302 = vrot.slane %v295, 6
        %303 = vrot.lane.b32.xlu0 %v301, 126
        %v304 = vpop.permute.xlu0 %303
        %305 = vrot.lane.b32.xlu0 %v302, 126
        %v306 = vpop.permute.xlu0 %305
        %vm307 = vcmask 1031168
        %v308 = vsel %vm307, %v304, %v306
        %v309 = vrot.slane %v299, 4
        %v310 = vrot.slane %v295, 4
        %311 = vrot.lane.b32.xlu0 %v309, 124
        %v312 = vpop.permute.xlu0 %311
        %313 = vrot.lane.b32.xlu0 %v310, 124
        %v314 = vpop.permute.xlu0 %313
        %vm315 = vcmask 1014784
        %v316 = vsel %vm315, %v312, %v314
        %vm317 = vcmask 1041408
        %v319 = vsel %vm317, %v299, %v308
        %vm320 = vcmask 1043456
        %v322 = vsel %vm320, %v319, %v316
        %v323 = vld [vmem:[#allocation2] sm:$0xf]
        %v324 = vld [vmem:[%s1] sm:$0xff]
        %326 = vset.pattern.permute.xlu0 0
        %327 = vperm.xlu0 %326, %v324
        %v328 = vpop.permute.xlu0 %327
        %vm330 = vcmask 97280
        %v332 = vsel %vm330, %v323, 0
        %vm334 = vcmask 1045504
        %v335 = vsel %vm334, %v322, 0
        %337 = vmatprep.subr.bf16.mxu0 0
        %338 = vmatpush1.bf16.msra.mxu0 %v335
        %339 = vmatprep.subr.bf16.mxu0 0
        %340 = vmatpush1.bf16.msra.mxu0 0
        %341 = vmatprep.subr.bf16.mxu0 0
        %342 = vmatpush1.bf16.msra.mxu0 0
        %343 = vmatprep.subr.bf16.mxu0 0
        %344 = vmatpush1.bf16.msra.mxu0 0
        %345 = vmatprep.subr.bf16.mxu0 0
        %346 = vmatpush1.bf16.msra.mxu0 0
        %347 = vmatprep.subr.bf16.mxu0 0
        %348 = vmatpush1.bf16.msra.mxu0 0
        %349 = vmatprep.subr.bf16.mxu0 0
        %350 = vmatpush1.bf16.msra.mxu0 0
        %351 = vmatprep.subr.bf16.mxu0 0
        %352 = vmatpush1.bf16.msra.mxu0 0
        %353 = vmatprep.subr.bf16.mxu0 0
        %354 = vmatpush1.bf16.msra.mxu0 0
        %355 = vmatprep.subr.bf16.mxu0 0
        %356 = vmatpush1.bf16.msra.mxu0 0
        %357 = vmatprep.subr.bf16.mxu0 0
        %358 = vmatpush1.bf16.msra.mxu0 0
        %359 = vmatprep.subr.bf16.mxu0 0
        %360 = vmatpush1.bf16.msra.mxu0 0
        %361 = vmatprep.subr.bf16.mxu0 0
        %362 = vmatpush1.bf16.msra.mxu0 0
        %363 = vmatprep.subr.bf16.mxu0 0
        %364 = vmatpush1.bf16.msra.mxu0 0
        %365 = vmatprep.subr.bf16.mxu0 0
        %366 = vmatpush1.bf16.msra.mxu0 0
        %367 = vmatprep.subr.bf16.mxu0 0
        %368 = vmatpush1.bf16.msra.mxu0 0
        %369 = vmatprep.mubr.bf16.mxu0 0
        %370 = vmatmul.mubr.bf16.gmra.mrb[0].mxu0 %v332
        %v371 = vpop.f32.mrb[0].mxu0
        %v372 = vadd.f32 %v328, %v371
        %v373 = vpop.f32.mrb[0].mxu0
        %v374 = vpop.f32.mrb[0].mxu0
        %v375 = vpop.f32.mrb[0].mxu0
        %376 = vdwg.mxu0
        %377 = vst [vmem:[%s259] sm:$0xff] %v372
        %s378 = sand.u32 %s145, 1
        %s379 = scalar_lea.sflag [#allocation4], %s378
        %s380 = sand.u32 %s145, 1
        %s381 = smul.addr %s380, 8
        %s382 = scalar_lea.vmem [#allocation5], %s381
        // Predicated region
        $region41: #{tpu_custom_call.1} parent=35 // pred_check
          %p383 = pneg %p155
        $region42: #{tpu_custom_call.1} parent=35 // pred_check_branch
          %385 = sbr.rel (%p383) target = $region44
        $region43: #{tpu_custom_call.1} parent=35 // pred_region
          %s387 = ssub.s32 128, 128
          %388 = vsyncadd %s379, %s387
          %s389 = sadd.s32 %s24, %s23
          %s390 = smul.addr %s389, 128
          %s391 = scalar_lea.hbm %s4, %s390
          %s393 = sshll.u32 %s382, 4
          %s394 = int_to_ptr.vmem [resolvable:$true] %s393
          %396 = dma.vmem_to_hbm [thread:$0]  %s394, 128, %s391, %s379
        $region44: #{tpu_custom_call.1} parent=35 // pred_fallthru
          _
      $region36: #{tpu_custom_call.1} parent=5 // pred_fallthru
        _
      %p397 = scmp.le.s32.totalorder 2, %s14
      // Predicated region
      $region45: #{tpu_custom_call.1} parent=5 // pred_check
        %p398 = pneg %p397
      $region46: #{tpu_custom_call.1} parent=5 // pred_check_branch
        %400 = sbr.rel (%p398) target = $region48
      $region47: #{tpu_custom_call.1} parent=5 // pred_region
        %s401 = ssub.s32 %s14, 2
        // Predicated region
        $region49: #{tpu_custom_call.1} parent=47 // pred_check
          %p402 = pneg %p161
        $region50: #{tpu_custom_call.1} parent=47 // pred_check_branch
          %404 = sbr.rel (%p402) target = $region52
        $region51: #{tpu_custom_call.1} parent=47 // pred_region
          %s405 = sand.u32 %s146, 1
          %s406 = scalar_lea.sflag [#allocation4], %s405
          %s407 = sand.u32 %s146, 1
          %s408 = smul.addr %s407, 8
          %s409 = scalar_lea.vmem [#allocation5], %s408
          %410 = dma.done %s406, 128
        $region52: #{tpu_custom_call.1} parent=47 // pred_fallthru
          _
      $region48: #{tpu_custom_call.1} parent=5 // pred_fallthru
        _
    $region6: #{tpu_custom_call.1} parent=1 // loop_footer
      %s18 = sadd.s32 1, %s14
    $region7: #{tpu_custom_call.1} parent=1 // loop_footer_branch
      %13 = sbr.rel target = $region3
    $region8: #{tpu_custom_call.1} parent=1 // loop_exit
      _
    %411 = vsyncpa [#allocation3], 1
    %s412 = scalar_lea.sflag [#allocation3], 1
    %413 = vsyncpa %s412, 1
    %414 = vsyncpa [#allocation4], 1
    %s415 = scalar_lea.sflag [#allocation4], 1
    %416 = vsyncpa %s415, 1

</llo_original>
